<compile_context>
chip_gen: v7x
topology: tpu7x:2x2x1
jax: 0.10.0
libtpu: 0.0.40
codegen_flags: <defaults>
</compile_context>

<pallas_src>
import functools

import jax
import jax.numpy as jnp
from jax.experimental import pallas as pl
from jax.experimental.pallas import tpu as pltpu

KERNEL_SIZES = (9, 19, 39)
BOTTLENECK = 32
BN_EPS = 1e-5
_LANE = 128
_SUBLANE = 8
_VMEM_LIMIT = 48 * 1024 * 1024   # safe on v5e/v6e (128 MiB) and v7x (64 MiB)


def _round_up(x, m):
    return ((x + m - 1) // m) * m


def _shift_left(x):
    """y[:, j] = x[:, j + 1]; last column zero-filled."""
    pad = jnp.zeros_like(x[:, :1])
    return jnp.concatenate([x[:, 1:], pad], axis=-1)


def _shift_right(x):
    """y[:, j] = x[:, j - 1]; first column zero-filled."""
    pad = jnp.zeros_like(x[:, :1])
    return jnp.concatenate([pad, x[:, :-1]], axis=-1)


def _fused_conv_unpool_kernel(xpad_ref, idx_ref, wall_ref,
                              s_ref, ssum_ref, ssq_ref, *, l_valid):
    """Per-batch fused pass.

    Computes S = bottleneck(concat(convT branches)) + MaxUnpool(conv1x1(x))
    for one batch element, plus per-channel sum / sum-of-squares partials for
    the batch-norm pass.  The branch/bottleneck weights arrive pre-folded into
    a single (2*C_out, k_max*C_in_p) matrix, so the whole conv stack is one
    MXU matmul against an im2col window matrix.
    """
    xpad = xpad_ref[0]          # (C_in_p, Lpad + 2*pmax)
    idx = idx_ref[0]            # (C_out, Lpad), int32
    w_all = wall_ref[...]       # (2*C_out, k_max*C_in_p)

    c_out, l_pad = idx.shape
    c_in_p = xpad.shape[0]
    k_max = w_all.shape[1] // c_in_p

    # im2col: windows[j*C_in_p + c, t] = xpad[c, t + j].  Each piece is an
    # (8k, 128m) full-tile slab, so the sublane concat is tile-aligned.
    windows = jnp.concatenate(
        [xpad[:, j:j + l_pad] for j in range(k_max)], axis=0)   # (k*C_in_p, Lpad)

    # one MXU matmul: rows [0, C_out)      -> bottleneck(concat(branches))
    #                 rows [C_out, 2*C_out) -> conv_to_maxpool(x)
    y = jnp.dot(w_all, windows, preferred_element_type=jnp.float32)
    bn = y[:c_out]
    z4 = y[c_out:]

    # MaxUnpool1d(k=3, s=1, p=1): out[c, idx[c, t]] = z4[c, t].  Valid pooling
    # indices satisfy idx[c, t] in {t-1, t, t+1}; on duplicates the largest t
    # wins (PyTorch CPU last-write-wins), hence the priority order below.
    t_iota = jax.lax.broadcasted_iota(jnp.int32, (c_out, l_pad), 1)
    d = idx - t_iota                                   # in {-1, 0, +1}
    d_next, z_next = _shift_left(d), _shift_left(z4)   # candidate t = j + 1
    d_prev, z_prev = _shift_right(d), _shift_right(z4)  # candidate t = j - 1
    mup = jnp.where(d_next == -1, z_next,
          jnp.where(d == 0, z4,
          jnp.where(d_prev == 1, z_prev, 0.0)))

    # zero the lane-padding columns so BN partial sums need no extra mask
    s = jnp.where(t_iota < l_valid, bn + mup, 0.0)

    s_ref[0] = s
    ssum_ref[0] = jnp.sum(s, axis=-1, keepdims=True)
    ssq_ref[0] = jnp.sum(s * s, axis=-1, keepdims=True)


def _bn_relu_kernel(s_ref, scale_ref, shift_ref, out_ref):
    """BatchNorm apply (host-precombined scale/shift) + ReLU, one batch/program."""
    out_ref[0] = jnp.maximum(s_ref[0] * scale_ref[...] + shift_ref[...], 0.0)


def init_params(key, in_channels, out_channels,
                kernel_sizes=KERNEL_SIZES, bottleneck_channels=BOTTLENECK):
    k1, k2, k3, k4, kb = jax.random.split(key, 5)
    scale = 0.1
    params = {
        # ConvTranspose1d weights: (in_channels, out_channels, kernel_size)
        "w1": scale * jax.random.normal(k1, (in_channels, bottleneck_channels,
                                             kernel_sizes[0]), jnp.float32),
        "w2": scale * jax.random.normal(k2, (in_channels, bottleneck_channels,
                                             kernel_sizes[1]), jnp.float32),
        "w3": scale * jax.random.normal(k3, (in_channels, bottleneck_channels,
                                             kernel_sizes[2]), jnp.float32),
        # conv_to_maxpool: Conv1d k=1 -> (out_channels, in_channels)
        "w4": scale * jax.random.normal(k4, (out_channels, in_channels),
                                        jnp.float32),
        # bottleneck: Conv1d k=1 -> (out_channels, 3*bottleneck)
        "wb": scale * jax.random.normal(kb, (out_channels,
                                             3 * bottleneck_channels),
                                        jnp.float32),
        # BatchNorm1d default init
        "gamma": jnp.ones((out_channels, 1), jnp.float32),
        "beta": jnp.zeros((out_channels, 1), jnp.float32),
    }
    return params


def inception_transpose(x, indices, params):
    B, C_in, L = x.shape
    C_out = params["w4"].shape[0]
    nb = params["w1"].shape[1]
    ks = KERNEL_SIZES
    k_max = max(ks)
    pmax = k_max // 2

    c_in_p = _round_up(C_in, _SUBLANE)     # sublane-aligned im2col pieces
    l_pad = _round_up(L, _LANE)            # lane-dense stores
    l_w = l_pad + 2 * pmax

    # ---- host-side glue (tiny, one-time): fold the bottleneck 1x1 conv into
    # the flipped ConvTranspose weights, stack conv_to_maxpool as extra rows ----
    w_merged = jnp.zeros((k_max, 2 * C_out, c_in_p), jnp.float32)
    for br, (name, k) in enumerate(zip(("w1", "w2", "w3"), ks)):
        w = params[name]                                    # (C_in, nb, k)
        wf = jnp.transpose(w[:, :, ::-1], (2, 1, 0))        # (k, nb, C_in)
        wb_b = params["wb"][:, br * nb:(br + 1) * nb]       # (C_out, nb)
        contrib = jnp.einsum("on,knc->koc", wb_b, wf)       # (k, C_out, C_in)
        off = pmax - k // 2
        w_merged = w_merged.at[off:off + k, :C_out, :C_in].add(contrib)
    w_merged = w_merged.at[pmax, C_out:, :C_in].set(params["w4"])
    w_all = jnp.transpose(w_merged, (1, 0, 2)).reshape(2 * C_out,
                                                       k_max * c_in_p)

    xpad = jnp.pad(x, ((0, 0), (0, c_in_p - C_in), (pmax, pmax + l_pad - L)))
    indices = indices.astype(jnp.int32)
    if l_pad > L:
        # padded index columns point at themselves -> never leak into valid t
        pad_idx = jnp.broadcast_to(
            jnp.arange(L, l_pad, dtype=jnp.int32), (B, C_out, l_pad - L))
        indices = jnp.concatenate([indices, pad_idx], axis=-1)

    cparams = pltpu.CompilerParams(dimension_semantics=("parallel",),
                                   vmem_limit_bytes=_VMEM_LIMIT)

    # ---- Kernel A: fused branches + bottleneck + 1x1 conv + max-unpool + BN partials ----
    # TODO(synk): for very large L / B, add an L-tile grid axis with a 2*pmax
    # halo (and batch-block small B into the matmul N dim) to bound the
    # per-program VMEM working set and fill the MXU M dimension.
    s, ssum, ssq = pl.pallas_call(
        functools.partial(_fused_conv_unpool_kernel, l_valid=L),
        out_shape=(
            jax.ShapeDtypeStruct((B, C_out, l_pad), jnp.float32),
            jax.ShapeDtypeStruct((B, C_out, 1), jnp.float32),
            jax.ShapeDtypeStruct((B, C_out, 1), jnp.float32),
        ),
        grid=(B,),
        in_specs=[
            pl.BlockSpec((1, c_in_p, l_w), lambda b: (b, 0, 0)),
            pl.BlockSpec((1, C_out, l_pad), lambda b: (b, 0, 0)),
            pl.BlockSpec((2 * C_out, k_max * c_in_p), lambda b: (0, 0)),
        ],
        out_specs=[
            pl.BlockSpec((1, C_out, l_pad), lambda b: (b, 0, 0)),
            pl.BlockSpec((1, C_out, 1), lambda b: (b, 0, 0)),
            pl.BlockSpec((1, C_out, 1), lambda b: (b, 0, 0)),
        ],
        compiler_params=cparams,
    )(xpad, indices, w_all)

    # ---- tiny O(B*C_out) batch-statistic combine (host glue) ----
    count = B * L
    mean = jnp.sum(ssum, axis=0) / count                  # (C_out, 1)
    var = jnp.sum(ssq, axis=0) / count - mean * mean      # biased variance
    inv = jax.lax.rsqrt(var + BN_EPS)
    scale = params["gamma"] * inv
    shift = params["beta"] - mean * scale

    # ---- Kernel B: tiled, grid-parallel normalize + ReLU ----
    out = pl.pallas_call(
        _bn_relu_kernel,
        out_shape=jax.ShapeDtypeStruct((B, C_out, l_pad), jnp.float32),
        grid=(B,),
        in_specs=[
            pl.BlockSpec((1, C_out, l_pad), lambda b: (b, 0, 0)),
            pl.BlockSpec((C_out, 1), lambda b: (0, 0)),
            pl.BlockSpec((C_out, 1), lambda b: (0, 0)),
        ],
        out_specs=pl.BlockSpec((1, C_out, l_pad), lambda b: (b, 0, 0)),
        compiler_params=cparams,
    )(s, scale, shift)
    return out[:, :, :L]


def _reference(x, indices, params):
    """Pure-JAX reference (independent formulation) for a sanity check."""
    B, C_in, L = x.shape
    ks = KERNEL_SIZES

    def convtr(w, k):
        # ConvTranspose1d, stride=1, padding=k//2, no bias.
        p = k // 2
        xp = jnp.pad(x, ((0, 0), (0, 0), (p, p)))
        out = jnp.zeros((B, w.shape[1], L), jnp.float32)
        for j in range(k):
            out = out + jnp.einsum("co,bcl->bol", w[:, :, j],
                                   xp[:, :, 2 * p - j: 2 * p - j + L])
        return out

    z = jnp.concatenate([convtr(params["w1"], ks[0]),
                         convtr(params["w2"], ks[1]),
                         convtr(params["w3"], ks[2])], axis=1)
    bn = jnp.einsum("oc,bcl->bol", params["wb"], z)
    z4 = jnp.einsum("oc,bcl->bol", params["w4"], x)

    # general MaxUnpool scatter, last-write-wins
    lpos = jnp.arange(L)
    tpos = jnp.arange(L)[None, None, :, None]
    match = indices[..., :, None] == lpos[None, None, None, :]
    rank = jnp.where(match, tpos + 1, 0)
    tstar = jnp.max(rank, axis=2, keepdims=True)
    sel = match & (rank == tstar) & (tstar > 0)
    mup = jnp.sum(jnp.where(sel, z4[..., :, None], 0.0), axis=2)

    s = bn + mup
    mean = jnp.mean(s, axis=(0, 2), keepdims=True)
    var = jnp.mean((s - mean) ** 2, axis=(0, 2), keepdims=True)
    y = (s - mean) * jax.lax.rsqrt(var + BN_EPS)
    y = y * params["gamma"][None] + params["beta"][None]
    return jnp.maximum(y, 0.0)


if __name__ == "__main__":
    B, C_in, L = 2, 4, 32
    C_out = 8

    key = jax.random.PRNGKey(0)
    k_x, k_pool, k_w = jax.random.split(key, 3)
    x = jax.random.normal(k_x, (B, C_in, L), jnp.float32)

    # realistic MaxPool1d(kernel=3, stride=1, padding=1, return_indices=True)
    # indices: idx[b,c,t] = argmax over the (clamped) window {t-1, t, t+1}
    r = jax.random.normal(k_pool, (B, C_out, L), jnp.float32)
    rpad = jnp.pad(r, ((0, 0), (0, 0), (1, 1)), constant_values=-jnp.inf)
    win = jnp.stack([rpad[:, :, i:i + L] for i in range(3)], axis=-1)
    indices = (jnp.arange(L, dtype=jnp.int32)[None, None, :]
               + jnp.argmax(win, axis=-1).astype(jnp.int32) - 1)

    params = init_params(k_w, C_in, C_out)

    y = inception_transpose(x, indices, params)
    y = jax.block_until_ready(y)

    y_ref = _reference(x, indices, params)
    assert y.shape == (B, C_out, L)
    assert bool(jnp.all(y >= 0.0))
    assert bool(jnp.allclose(y, y_ref, atol=5e-2, rtol=5e-2)), (
        float(jnp.max(jnp.abs(y - y_ref))))
    print("KERNEL_OK")
</pallas_src>

<mosaic_0001>
module attributes {stable_mosaic.version = 11 : i64} {
  func.func @_fused_conv_unpool_kernel(%arg0: i32, %arg1: memref<1x8x166xf32, #tpu.memory_space<vmem>>, %arg2: memref<1x8x128xi32, #tpu.memory_space<vmem>>, %arg3: memref<16x312xf32, #tpu.memory_space<vmem>>, %arg4: memref<1x8x128xf32, #tpu.memory_space<vmem>>, %arg5: memref<1x8x1xf32, #tpu.memory_space<vmem>>, %arg6: memref<1x8x1xf32, #tpu.memory_space<vmem>>) attributes {dimension_semantics = [#tpu.dimension_semantics<parallel>], iteration_bounds = array<i64: 2>, scalar_prefetch = 0 : i64, scratch_operands = 0 : i64, tpu.core_type = #tpu.core_type<tc>, window_params = [{transform_indices = @transform_0, window_bounds = array<i64: 1, 8, 166>}, {transform_indices = @transform_1, window_bounds = array<i64: 1, 8, 128>}, {pipeline_mode = #tpu.pipeline_mode<synchronous>, transform_indices = @transform_2, window_bounds = array<i64: 16, 312>}, {transform_indices = @transform_3, window_bounds = array<i64: 1, 8, 128>}, {transform_indices = @transform_4, window_bounds = array<i64: 1, 8, 1>}, {transform_indices = @transform_5, window_bounds = array<i64: 1, 8, 1>}]} {
    %c0 = arith.constant 0 : index
    %c0_0 = arith.constant 0 : index
    %c0_1 = arith.constant 0 : index
    %0 = vector.load %arg1[%c0, %c0_0, %c0_1] : memref<1x8x166xf32, #tpu.memory_space<vmem>>, vector<1x8x166xf32>
    %1 = vector.shape_cast %0 : vector<1x8x166xf32> to vector<8x166xf32>
    %c0_2 = arith.constant 0 : index
    %c0_3 = arith.constant 0 : index
    %c0_4 = arith.constant 0 : index
    %2 = vector.load %arg2[%c0_2, %c0_3, %c0_4] : memref<1x8x128xi32, #tpu.memory_space<vmem>>, vector<1x8x128xi32>
    %3 = vector.shape_cast %2 : vector<1x8x128xi32> to vector<8x128xi32>
    %c0_5 = arith.constant 0 : index
    %c0_6 = arith.constant 0 : index
    %4 = vector.load %arg3[%c0_5, %c0_6] : memref<16x312xf32, #tpu.memory_space<vmem>>, vector<16x312xf32>
    %5 = vector.extract_strided_slice %1 {offsets = [0, 0], sizes = [8, 128], strides = [1, 1]} : vector<8x166xf32> to vector<8x128xf32>
    %6 = vector.extract_strided_slice %1 {offsets = [0, 1], sizes = [8, 128], strides = [1, 1]} : vector<8x166xf32> to vector<8x128xf32>
    %7 = vector.extract_strided_slice %1 {offsets = [0, 2], sizes = [8, 128], strides = [1, 1]} : vector<8x166xf32> to vector<8x128xf32>
    %8 = vector.extract_strided_slice %1 {offsets = [0, 3], sizes = [8, 128], strides = [1, 1]} : vector<8x166xf32> to vector<8x128xf32>
    %9 = vector.extract_strided_slice %1 {offsets = [0, 4], sizes = [8, 128], strides = [1, 1]} : vector<8x166xf32> to vector<8x128xf32>
    %10 = vector.extract_strided_slice %1 {offsets = [0, 5], sizes = [8, 128], strides = [1, 1]} : vector<8x166xf32> to vector<8x128xf32>
    %11 = vector.extract_strided_slice %1 {offsets = [0, 6], sizes = [8, 128], strides = [1, 1]} : vector<8x166xf32> to vector<8x128xf32>
    %12 = vector.extract_strided_slice %1 {offsets = [0, 7], sizes = [8, 128], strides = [1, 1]} : vector<8x166xf32> to vector<8x128xf32>
    %13 = vector.extract_strided_slice %1 {offsets = [0, 8], sizes = [8, 128], strides = [1, 1]} : vector<8x166xf32> to vector<8x128xf32>
    %14 = vector.extract_strided_slice %1 {offsets = [0, 9], sizes = [8, 128], strides = [1, 1]} : vector<8x166xf32> to vector<8x128xf32>
    %15 = vector.extract_strided_slice %1 {offsets = [0, 10], sizes = [8, 128], strides = [1, 1]} : vector<8x166xf32> to vector<8x128xf32>
    %16 = vector.extract_strided_slice %1 {offsets = [0, 11], sizes = [8, 128], strides = [1, 1]} : vector<8x166xf32> to vector<8x128xf32>
    %17 = vector.extract_strided_slice %1 {offsets = [0, 12], sizes = [8, 128], strides = [1, 1]} : vector<8x166xf32> to vector<8x128xf32>
    %18 = vector.extract_strided_slice %1 {offsets = [0, 13], sizes = [8, 128], strides = [1, 1]} : vector<8x166xf32> to vector<8x128xf32>
    %19 = vector.extract_strided_slice %1 {offsets = [0, 14], sizes = [8, 128], strides = [1, 1]} : vector<8x166xf32> to vector<8x128xf32>
    %20 = vector.extract_strided_slice %1 {offsets = [0, 15], sizes = [8, 128], strides = [1, 1]} : vector<8x166xf32> to vector<8x128xf32>
    %21 = vector.extract_strided_slice %1 {offsets = [0, 16], sizes = [8, 128], strides = [1, 1]} : vector<8x166xf32> to vector<8x128xf32>
    %22 = vector.extract_strided_slice %1 {offsets = [0, 17], sizes = [8, 128], strides = [1, 1]} : vector<8x166xf32> to vector<8x128xf32>
    %23 = vector.extract_strided_slice %1 {offsets = [0, 18], sizes = [8, 128], strides = [1, 1]} : vector<8x166xf32> to vector<8x128xf32>
    %24 = vector.extract_strided_slice %1 {offsets = [0, 19], sizes = [8, 128], strides = [1, 1]} : vector<8x166xf32> to vector<8x128xf32>
    %25 = vector.extract_strided_slice %1 {offsets = [0, 20], sizes = [8, 128], strides = [1, 1]} : vector<8x166xf32> to vector<8x128xf32>
    %26 = vector.extract_strided_slice %1 {offsets = [0, 21], sizes = [8, 128], strides = [1, 1]} : vector<8x166xf32> to vector<8x128xf32>
    %27 = vector.extract_strided_slice %1 {offsets = [0, 22], sizes = [8, 128], strides = [1, 1]} : vector<8x166xf32> to vector<8x128xf32>
    %28 = vector.extract_strided_slice %1 {offsets = [0, 23], sizes = [8, 128], strides = [1, 1]} : vector<8x166xf32> to vector<8x128xf32>
    %29 = vector.extract_strided_slice %1 {offsets = [0, 24], sizes = [8, 128], strides = [1, 1]} : vector<8x166xf32> to vector<8x128xf32>
    %30 = vector.extract_strided_slice %1 {offsets = [0, 25], sizes = [8, 128], strides = [1, 1]} : vector<8x166xf32> to vector<8x128xf32>
    %31 = vector.extract_strided_slice %1 {offsets = [0, 26], sizes = [8, 128], strides = [1, 1]} : vector<8x166xf32> to vector<8x128xf32>
    %32 = vector.extract_strided_slice %1 {offsets = [0, 27], sizes = [8, 128], strides = [1, 1]} : vector<8x166xf32> to vector<8x128xf32>
    %33 = vector.extract_strided_slice %1 {offsets = [0, 28], sizes = [8, 128], strides = [1, 1]} : vector<8x166xf32> to vector<8x128xf32>
    %34 = vector.extract_strided_slice %1 {offsets = [0, 29], sizes = [8, 128], strides = [1, 1]} : vector<8x166xf32> to vector<8x128xf32>
    %35 = vector.extract_strided_slice %1 {offsets = [0, 30], sizes = [8, 128], strides = [1, 1]} : vector<8x166xf32> to vector<8x128xf32>
    %36 = vector.extract_strided_slice %1 {offsets = [0, 31], sizes = [8, 128], strides = [1, 1]} : vector<8x166xf32> to vector<8x128xf32>
    %37 = vector.extract_strided_slice %1 {offsets = [0, 32], sizes = [8, 128], strides = [1, 1]} : vector<8x166xf32> to vector<8x128xf32>
    %38 = vector.extract_strided_slice %1 {offsets = [0, 33], sizes = [8, 128], strides = [1, 1]} : vector<8x166xf32> to vector<8x128xf32>
    %39 = vector.extract_strided_slice %1 {offsets = [0, 34], sizes = [8, 128], strides = [1, 1]} : vector<8x166xf32> to vector<8x128xf32>
    %40 = vector.extract_strided_slice %1 {offsets = [0, 35], sizes = [8, 128], strides = [1, 1]} : vector<8x166xf32> to vector<8x128xf32>
    %41 = vector.extract_strided_slice %1 {offsets = [0, 36], sizes = [8, 128], strides = [1, 1]} : vector<8x166xf32> to vector<8x128xf32>
    %42 = vector.extract_strided_slice %1 {offsets = [0, 37], sizes = [8, 128], strides = [1, 1]} : vector<8x166xf32> to vector<8x128xf32>
    %43 = vector.extract_strided_slice %1 {offsets = [0, 38], sizes = [8, 128], strides = [1, 1]} : vector<8x166xf32> to vector<8x128xf32>
    %44 = tpu.concatenate %5, %6, %7, %8, %9, %10, %11, %12, %13, %14, %15, %16, %17, %18, %19, %20 in 0 : vector<8x128xf32>, vector<8x128xf32>, vector<8x128xf32>, vector<8x128xf32>, vector<8x128xf32>, vector<8x128xf32>, vector<8x128xf32>, vector<8x128xf32>, vector<8x128xf32>, vector<8x128xf32>, vector<8x128xf32>, vector<8x128xf32>, vector<8x128xf32>, vector<8x128xf32>, vector<8x128xf32>, vector<8x128xf32> -> vector<128x128xf32>
    %45 = tpu.concatenate %21, %22, %23, %24, %25, %26, %27, %28, %29, %30, %31, %32, %33, %34, %35, %36 in 0 : vector<8x128xf32>, vector<8x128xf32>, vector<8x128xf32>, vector<8x128xf32>, vector<8x128xf32>, vector<8x128xf32>, vector<8x128xf32>, vector<8x128xf32>, vector<8x128xf32>, vector<8x128xf32>, vector<8x128xf32>, vector<8x128xf32>, vector<8x128xf32>, vector<8x128xf32>, vector<8x128xf32>, vector<8x128xf32> -> vector<128x128xf32>
    %46 = tpu.concatenate %37, %38, %39, %40, %41, %42, %43 in 0 : vector<8x128xf32>, vector<8x128xf32>, vector<8x128xf32>, vector<8x128xf32>, vector<8x128xf32>, vector<8x128xf32>, vector<8x128xf32> -> vector<56x128xf32>
    %47 = tpu.concatenate %44, %45, %46 in 0 : vector<128x128xf32>, vector<128x128xf32>, vector<56x128xf32> -> vector<312x128xf32>
    %cst = arith.constant dense<0.000000e+00> : vector<16x128xf32>
    %48 = tpu.matmul %4, %47, %cst {dimension_numbers = #tpu.dot_dimension_numbers<[1], [0], [0], [1], [0, 0, 1, 1], [], []>} : vector<16x312xf32>, vector<312x128xf32>, vector<16x128xf32> -> vector<16x128xf32>
    %49 = vector.extract_strided_slice %48 {offsets = [0, 0], sizes = [8, 128], strides = [1, 1]} : vector<16x128xf32> to vector<8x128xf32>
    %50 = vector.extract_strided_slice %48 {offsets = [8, 0], sizes = [8, 128], strides = [1, 1]} : vector<16x128xf32> to vector<8x128xf32>
    %51 = tpu.iota {dimensions = array<i32: 1>} : vector<8x128xi32>
    %52 = arith.subi %3, %51 : vector<8x128xi32>
    %c0_i32 = arith.constant 0 : i32
    %53 = vector.broadcast %c0_i32 : i32 to vector<8x1xi32>
    %54 = vector.extract_strided_slice %52 {offsets = [0, 1], sizes = [8, 127], strides = [1, 1]} : vector<8x128xi32> to vector<8x127xi32>
    %55 = tpu.concatenate %54, %53 in 1 : vector<8x127xi32>, vector<8x1xi32> -> vector<8x128xi32>
    %cst_7 = arith.constant 0.000000e+00 : f32
    %56 = vector.broadcast %cst_7 : f32 to vector<8x1xf32>
    %57 = vector.extract_strided_slice %50 {offsets = [0, 1], sizes = [8, 127], strides = [1, 1]} : vector<8x128xf32> to vector<8x127xf32>
    %58 = tpu.concatenate %57, %56 in 1 : vector<8x127xf32>, vector<8x1xf32> -> vector<8x128xf32>
    %c0_i32_8 = arith.constant 0 : i32
    %59 = vector.broadcast %c0_i32_8 : i32 to vector<8x1xi32>
    %60 = vector.extract_strided_slice %52 {offsets = [0, 0], sizes = [8, 127], strides = [1, 1]} : vector<8x128xi32> to vector<8x127xi32>
    %61 = tpu.concatenate %59, %60 in 1 : vector<8x1xi32>, vector<8x127xi32> -> vector<8x128xi32>
    %cst_9 = arith.constant 0.000000e+00 : f32
    %62 = vector.broadcast %cst_9 : f32 to vector<8x1xf32>
    %63 = vector.extract_strided_slice %50 {offsets = [0, 0], sizes = [8, 127], strides = [1, 1]} : vector<8x128xf32> to vector<8x127xf32>
    %64 = tpu.concatenate %62, %63 in 1 : vector<8x1xf32>, vector<8x127xf32> -> vector<8x128xf32>
    %c-1_i32 = arith.constant -1 : i32
    %65 = vector.broadcast %c-1_i32 : i32 to vector<8x128xi32>
    %66 = arith.cmpi eq, %55, %65 : vector<8x128xi32>
    %c0_i32_10 = arith.constant 0 : i32
    %67 = vector.broadcast %c0_i32_10 : i32 to vector<8x128xi32>
    %68 = arith.cmpi eq, %52, %67 : vector<8x128xi32>
    %c1_i32 = arith.constant 1 : i32
    %69 = vector.broadcast %c1_i32 : i32 to vector<8x128xi32>
    %70 = arith.cmpi eq, %61, %69 : vector<8x128xi32>
    %cst_11 = arith.constant 0.000000e+00 : f32
    %71 = vector.broadcast %cst_11 : f32 to vector<8x128xf32>
    %72 = arith.select %70, %64, %71 : vector<8x128xi1>, vector<8x128xf32>
    %73 = arith.select %68, %50, %72 : vector<8x128xi1>, vector<8x128xf32>
    %74 = arith.select %66, %58, %73 : vector<8x128xi1>, vector<8x128xf32>
    %c32_i32 = arith.constant 32 : i32
    %75 = vector.broadcast %c32_i32 : i32 to vector<8x128xi32>
    %76 = arith.cmpi slt, %51, %75 : vector<8x128xi32>
    %77 = arith.addf %49, %74 : vector<8x128xf32>
    %cst_12 = arith.constant 0.000000e+00 : f32
    %78 = vector.broadcast %cst_12 : f32 to vector<8x128xf32>
    %79 = arith.select %76, %77, %78 : vector<8x128xi1>, vector<8x128xf32>
    %c0_13 = arith.constant 0 : index
    %c0_14 = arith.constant 0 : index
    %c0_15 = arith.constant 0 : index
    %80 = vector.load %arg4[%c0_13, %c0_14, %c0_15] : memref<1x8x128xf32, #tpu.memory_space<vmem>>, vector<1x8x128xf32>
    %81 = vector.shape_cast %80 : vector<1x8x128xf32> to vector<8x128xf32>
    %82 = vector.shape_cast %79 : vector<8x128xf32> to vector<1x8x128xf32>
    tpu.vector_store %arg4[%c0_13, %c0_14, %c0_15], %82 {strides = array<i32>} : memref<1x8x128xf32, #tpu.memory_space<vmem>>, vector<1x8x128xf32>,
    %cst_16 = arith.constant dense<0.000000e+00> : vector<8xf32>
    %83 = vector.multi_reduction <add>, %79, %cst_16 [1] : vector<8x128xf32> to vector<8xf32>
    %84 = vector.shape_cast %83 : vector<8xf32> to vector<8x1xf32>
    %c0_17 = arith.constant 0 : index
    %c0_18 = arith.constant 0 : index
    %c0_19 = arith.constant 0 : index
    %85 = vector.load %arg5[%c0_17, %c0_18, %c0_19] : memref<1x8x1xf32, #tpu.memory_space<vmem>>, vector<1x8x1xf32>
    %86 = vector.shape_cast %85 : vector<1x8x1xf32> to vector<8x1xf32>
    %87 = vector.shape_cast %84 : vector<8x1xf32> to vector<1x8x1xf32>
    tpu.vector_store %arg5[%c0_17, %c0_18, %c0_19], %87 {strides = array<i32>} : memref<1x8x1xf32, #tpu.memory_space<vmem>>, vector<1x8x1xf32>,
    %88 = arith.mulf %79, %79 : vector<8x128xf32>
    %cst_20 = arith.constant dense<0.000000e+00> : vector<8xf32>
    %89 = vector.multi_reduction <add>, %88, %cst_20 [1] : vector<8x128xf32> to vector<8xf32>
    %90 = vector.shape_cast %89 : vector<8xf32> to vector<8x1xf32>
    %c0_21 = arith.constant 0 : index
    %c0_22 = arith.constant 0 : index
    %c0_23 = arith.constant 0 : index
    %91 = vector.load %arg6[%c0_21, %c0_22, %c0_23] : memref<1x8x1xf32, #tpu.memory_space<vmem>>, vector<1x8x1xf32>
    %92 = vector.shape_cast %91 : vector<1x8x1xf32> to vector<8x1xf32>
    %93 = vector.shape_cast %90 : vector<8x1xf32> to vector<1x8x1xf32>
    tpu.vector_store %arg6[%c0_21, %c0_22, %c0_23], %93 {strides = array<i32>} : memref<1x8x1xf32, #tpu.memory_space<vmem>>, vector<1x8x1xf32>,
    return
  }
  func.func @transform_0(%arg0: i32) -> (i32, i32, i32) {
    %c0_i32 = arith.constant 0 : i32
    %c0_i32_0 = arith.constant 0 : i32
    %c0_i32_1 = arith.constant 0 : i32
    return %arg0, %c0_i32, %c0_i32_0 : i32, i32, i32
  }
  func.func @transform_1(%arg0: i32) -> (i32, i32, i32) {
    %c0_i32 = arith.constant 0 : i32
    %c0_i32_0 = arith.constant 0 : i32
    %c0_i32_1 = arith.constant 0 : i32
    return %arg0, %c0_i32, %c0_i32_0 : i32, i32, i32
  }
  func.func @transform_2(%arg0: i32) -> (i32, i32) {
    %c0_i32 = arith.constant 0 : i32
    %c0_i32_0 = arith.constant 0 : i32
    %c0_i32_1 = arith.constant 0 : i32
    return %c0_i32, %c0_i32_0 : i32, i32
  }
  func.func @transform_3(%arg0: i32) -> (i32, i32, i32) {
    %c0_i32 = arith.constant 0 : i32
    %c0_i32_0 = arith.constant 0 : i32
    %c0_i32_1 = arith.constant 0 : i32
    return %arg0, %c0_i32, %c0_i32_0 : i32, i32, i32
  }
  func.func @transform_4(%arg0: i32) -> (i32, i32, i32) {
    %c0_i32 = arith.constant 0 : i32
    %c0_i32_0 = arith.constant 0 : i32
    %c0_i32_1 = arith.constant 0 : i32
    return %arg0, %c0_i32, %c0_i32_0 : i32, i32, i32
  }
  func.func @transform_5(%arg0: i32) -> (i32, i32, i32) {
    %c0_i32 = arith.constant 0 : i32
    %c0_i32_0 = arith.constant 0 : i32
    %c0_i32_1 = arith.constant 0 : i32
    return %arg0, %c0_i32, %c0_i32_0 : i32, i32, i32
  }
}

</mosaic_0001>

<llo_original>
// kernel: tpu_custom_call.1
$region0: #{tpu_custom_call.1}
  #allocation0 [shape = 'u32[]', space=smem, size = 0x4, offset = 0x4, fixed_abs, tag = 'smem constant byte address 0x4 - core index']
  #allocation1 [shape = 'u32[144,128]{1,0:T(1,128)}', space=vmem, size = 0x12000, scoped, tag = 'internal scratch']
  %s0 = inlined_call_operand.hbm [shape: f32[2,8,166], index: 0, kind: input, shape index: {}]
  %s1 = inlined_call_operand.hbm [shape: s32[2,8,128], index: 1, kind: input, shape index: {}]
  %s2 = inlined_call_operand.hbm [shape: f32[16,312], index: 2, kind: input, shape index: {}]
  %s3 = inlined_call_operand.hbm [shape: f32[2,8,128], index: 3, kind: output, shape index: {0}]
  %s4 = inlined_call_operand.vmem [shape: f32[2,8,1], index: 4, kind: output, shape index: {1}]
  %s5 = inlined_call_operand.vmem [shape: f32[2,8,1], index: 5, kind: output, shape index: {2}]
  %6 = xla_tuple %s3, %s4, %s5
  %s7 = sld [smem:[#allocation0]]
  $region73: #{tpu_custom_call.1} parent=0
    _
  %s9 = ssub.s32 1, %s7
  %s10 = scalar_select 0, %s9, %s7
  $region1: #{tpu_custom_call.1} parent=0
    #allocation2 [shape = 'u8[16384]{0}', space=vmem, size = 0x4000, scoped, tag = 'input window, operand 0']
    #allocation3 [shape = 's32[2]{0}', space=sflag, size = 0x8, scoped, tag = 'scoped memory for tpu_custom_call.1']
    #allocation4 [shape = 's32[2]{0}', space=sflag, size = 0x8, scoped, tag = 'scoped memory for tpu_custom_call.1']
    #allocation5 [shape = 'u8[8192]{0}', space=vmem, size = 0x2000, scoped, tag = 'input window, operand 1']
    #allocation6 [shape = 's32[2]{0}', space=sflag, size = 0x8, scoped, tag = 'scoped memory for tpu_custom_call.1']
    #allocation7 [shape = 'u8[24576]{0}', space=vmem, size = 0x6000, scoped, tag = 'input window, operand 2, single buffered']
    #allocation8 [shape = 'u8[8192]{0}', space=vmem, size = 0x2000, scoped, tag = 'output window, operand 0']
    %11 = vsyncpa [#allocation3], 0
    %s12 = scalar_lea.sflag [#allocation3], 1
    %13 = vsyncpa %s12, 0
    %14 = vsyncpa [#allocation6], 0
    %s15 = scalar_lea.sflag [#allocation6], 1
    %16 = vsyncpa %s15, 0
    %17 = vsyncpa [#allocation4], 0
    %s18 = scalar_lea.sflag [#allocation4], 1
    %19 = vsyncpa %s18, 0
    loop: start=0, step=1, limit=4
    $region2: #{tpu_custom_call.1} parent=1 // loop_pre_header
      _
    $region3: #{tpu_custom_call.1} parent=1 // loop_header
      %s21 = sphi 0, %s25
      %p22 = scmp.ge.s32.totalorder %s21, 4
      %s31 = sphi 0, %s33
      %s34 = sphi 0, %s31
      %s35 = sphi 0, %s34
      %s51 = sphi 0, %s35
      %s57 = sphi 0, %s59
      %s60 = sphi 0, %s57
      %s61 = sphi 0, %s60
      %s77 = sphi 0, %s61
      %s81 = sphi 0, %s81
      %s83 = sphi 0, %s81
      %s84 = sphi 0, %s83
      %s98 = sphi 0, %s84
      %s104 = sphi 0, %s106
      %s107 = sphi 0, %s104
      %s108 = sphi 0, %s107
      %s124 = sphi 0, %s108
      %s130 = sphi 0, %s132
      %s133 = sphi 0, %s130
      %s134 = sphi 0, %s133
      %s150 = sphi 0, %s134
      %s156 = sphi 0, %s158
      %s159 = sphi 0, %s156
      %s160 = sphi 0, %s159
      %s176 = sphi 0, %s160
    $region4: #{tpu_custom_call.1} parent=1 // loop_header_branch
      %24 = sbr.rel (%p22) target = $region8
    $region5: #{tpu_custom_call.1} parent=1 // loop_body
      %s26 = ssub.s32 %s21, 1
      %s27 = ssub.s32 %s21, 2
      %s28 = sadd.s32 %s21, 1
      %s29 = ssub.s32 %s21, %s28
      %p30 = scmp.eq.s32.totalorder %s29, 0
      %s32 = sadd.s32 %s31, 1
      %s33 = scalar_select %p30, %s31, %s32
      %p36 = pneg %p30
      %p37 = scmp.eq.s32.totalorder %s21, 1
      %p38 = por %p36, %p37
      %p39 = scmp.ne.s32.totalorder %s31, %s34
      %p40 = scmp.eq.s32.totalorder %s21, 0
      %p41 = por %p39, %p40
      %p42 = scmp.ne.s32.totalorder %s31, %s34
      %p43 = scmp.eq.s32.totalorder %s26, 1
      %p44 = por %p42, %p43
      %p45 = scmp.ne.s32.totalorder %s34, %s35
      %p46 = scmp.eq.s32.totalorder %s26, 0
      %p47 = por %p45, %p46
      %p48 = scmp.ne.s32.totalorder %s34, %s35
      %p49 = scmp.eq.s32.totalorder %s27, 1
      %p50 = por %p48, %p49
      %p52 = scmp.ne.s32.totalorder %s35, %s51
      %p53 = scmp.eq.s32.totalorder %s27, 0
      %p54 = por %p52, %p53
      %s55 = ssub.s32 %s21, %s28
      %p56 = scmp.eq.s32.totalorder %s55, 0
      %s58 = sadd.s32 %s57, 1
      %s59 = scalar_select %p56, %s57, %s58
      %p62 = pneg %p56
      %p63 = scmp.eq.s32.totalorder %s21, 1
      %p64 = por %p62, %p63
      %p65 = scmp.ne.s32.totalorder %s57, %s60
      %p66 = scmp.eq.s32.totalorder %s21, 0
      %p67 = por %p65, %p66
      %p68 = scmp.ne.s32.totalorder %s57, %s60
      %p69 = scmp.eq.s32.totalorder %s26, 1
      %p70 = por %p68, %p69
      %p71 = scmp.ne.s32.totalorder %s60, %s61
      %p72 = scmp.eq.s32.totalorder %s26, 0
      %p73 = por %p71, %p72
      %p74 = scmp.ne.s32.totalorder %s60, %s61
      %p75 = scmp.eq.s32.totalorder %s27, 1
      %p76 = por %p74, %p75
      %p78 = scmp.ne.s32.totalorder %s61, %s77
      %p79 = scmp.eq.s32.totalorder %s27, 0
      %p80 = por %p78, %p79
      %s82 = sadd.s32 %s81, 1
      %p85 = scmp.eq.s32.totalorder %s21, 1
      %p86 = scmp.ne.s32.totalorder %s81, %s83
      %p87 = scmp.eq.s32.totalorder %s21, 0
      %p88 = por %p86, %p87
      %p89 = scmp.ne.s32.totalorder %s81, %s83
      %p90 = scmp.eq.s32.totalorder %s26, 1
      %p91 = por %p89, %p90
      %p92 = scmp.ne.s32.totalorder %s83, %s84
      %p93 = scmp.eq.s32.totalorder %s26, 0
      %p94 = por %p92, %p93
      %p95 = scmp.ne.s32.totalorder %s83, %s84
      %p96 = scmp.eq.s32.totalorder %s27, 1
      %p97 = por %p95, %p96
      %p99 = scmp.ne.s32.totalorder %s84, %s98
      %p100 = scmp.eq.s32.totalorder %s27, 0
      %p101 = por %p99, %p100
      %s102 = ssub.s32 %s21, %s28
      %p103 = scmp.eq.s32.totalorder %s102, 0
      %s105 = sadd.s32 %s104, 1
      %s106 = scalar_select %p103, %s104, %s105
      %p109 = pneg %p103
      %p110 = scmp.eq.s32.totalorder %s21, 1
      %p111 = por %p109, %p110
      %p112 = scmp.ne.s32.totalorder %s104, %s107
      %p113 = scmp.eq.s32.totalorder %s21, 0
      %p114 = por %p112, %p113
      %p115 = scmp.ne.s32.totalorder %s104, %s107
      %p116 = scmp.eq.s32.totalorder %s26, 1
      %p117 = por %p115, %p116
      %p118 = scmp.ne.s32.totalorder %s107, %s108
      %p119 = scmp.eq.s32.totalorder %s26, 0
      %p120 = por %p118, %p119
      %p121 = scmp.ne.s32.totalorder %s107, %s108
      %p122 = scmp.eq.s32.totalorder %s27, 1
      %p123 = por %p121, %p122
      %p125 = scmp.ne.s32.totalorder %s108, %s124
      %p126 = scmp.eq.s32.totalorder %s27, 0
      %p127 = por %p125, %p126
      %s128 = ssub.s32 %s21, %s28
      %p129 = scmp.eq.s32.totalorder %s128, 0
      %s131 = sadd.s32 %s130, 1
      %s132 = scalar_select %p129, %s130, %s131
      %p135 = pneg %p129
      %p136 = scmp.eq.s32.totalorder %s21, 1
      %p137 = por %p135, %p136
      %p138 = scmp.ne.s32.totalorder %s130, %s133
      %p139 = scmp.eq.s32.totalorder %s21, 0
      %p140 = por %p138, %p139
      %p141 = scmp.ne.s32.totalorder %s130, %s133
      %p142 = scmp.eq.s32.totalorder %s26, 1
      %p143 = por %p141, %p142
      %p144 = scmp.ne.s32.totalorder %s133, %s134
      %p145 = scmp.eq.s32.totalorder %s26, 0
      %p146 = por %p144, %p145
      %p147 = scmp.ne.s32.totalorder %s133, %s134
      %p148 = scmp.eq.s32.totalorder %s27, 1
      %p149 = por %p147, %p148
      %p151 = scmp.ne.s32.totalorder %s134, %s150
      %p152 = scmp.eq.s32.totalorder %s27, 0
      %p153 = por %p151, %p152
      %s154 = ssub.s32 %s21, %s28
      %p155 = scmp.eq.s32.totalorder %s154, 0
      %s157 = sadd.s32 %s156, 1
      %s158 = scalar_select %p155, %s156, %s157
      %p161 = pneg %p155
      %p162 = scmp.eq.s32.totalorder %s21, 1
      %p163 = por %p161, %p162
      %p164 = scmp.ne.s32.totalorder %s156, %s159
      %p165 = scmp.eq.s32.totalorder %s21, 0
      %p166 = por %p164, %p165
      %p167 = scmp.ne.s32.totalorder %s156, %s159
      %p168 = scmp.eq.s32.totalorder %s26, 1
      %p169 = por %p167, %p168
      %p170 = scmp.ne.s32.totalorder %s159, %s160
      %p171 = scmp.eq.s32.totalorder %s26, 0
      %p172 = por %p170, %p171
      %p173 = scmp.ne.s32.totalorder %s159, %s160
      %p174 = scmp.eq.s32.totalorder %s27, 1
      %p175 = por %p173, %p174
      %p177 = scmp.ne.s32.totalorder %s160, %s176
      %p178 = scmp.eq.s32.totalorder %s27, 0
      %p179 = por %p177, %p178
      %p180 = scmp.le.s32.totalorder 1, %s21
      %p181 = scmp.lt.s32.totalorder %s21, 3
      %p182 = pnand %p180, %p181
      %p183 = pneg %p182
      // Predicated region
      $region9: #{tpu_custom_call.1} parent=5 // pred_check
        _
      $region10: #{tpu_custom_call.1} parent=5 // pred_check_branch
        %185 = sbr.rel (%p182) target = $region12
      $region11: #{tpu_custom_call.1} parent=5 // pred_region
        %s186 = ssub.s32 %s21, 1
        // Predicated region
        $region13: #{tpu_custom_call.1} parent=11 // pred_check
          %p187 = pneg %p94
        $region14: #{tpu_custom_call.1} parent=11 // pred_check_branch
          %189 = sbr.rel (%p187) target = $region16
        $region15: #{tpu_custom_call.1} parent=11 // pred_region
          %s191 = ssub.s32 768, 768
          %192 = vsyncadd [#allocation6], %s191
          %s193 = sshll.u32 [#allocation7], 4
          %s194 = int_to_ptr.vmem [resolvable:$true] %s193
          %199 = dma.hbm_to_vmem [thread:$0]  %s2, 768, %s194, [#allocation6], 384, 384, 24
        $region16: #{tpu_custom_call.1} parent=11 // pred_fallthru
          _
      $region12: #{tpu_custom_call.1} parent=5 // pred_fallthru
        _
      %p200 = scmp.lt.s32.totalorder %s21, 2
      // Predicated region
      $region17: #{tpu_custom_call.1} parent=5 // pred_check
        %p201 = pneg %p200
      $region18: #{tpu_custom_call.1} parent=5 // pred_check_branch
        %203 = sbr.rel (%p201) target = $region20
      $region19: #{tpu_custom_call.1} parent=5 // pred_region
        // Predicated region
        $region21: #{tpu_custom_call.1} parent=19 // pred_check
          %p204 = pneg %p41
        $region22: #{tpu_custom_call.1} parent=19 // pred_check_branch
          %206 = sbr.rel (%p204) target = $region24
        $region23: #{tpu_custom_call.1} parent=19 // pred_region
          %s207 = sand.u32 %s31, 1
          %s208 = scalar_lea.sflag [#allocation3], %s207
          %s209 = sand.u32 %s31, 1
          %s210 = smul.addr %s209, 16
          %s211 = scalar_lea.vmem [#allocation2], %s210
          %s213 = ssub.s32 256, 256
          %214 = vsyncadd %s208, %s213
          %s215 = smul.addr %s21, 2
          %s216 = smul.addr %s215, 128
          %s217 = scalar_lea.hbm %s0, %s216
          %s219 = sshll.u32 %s211, 4
          %s220 = int_to_ptr.vmem [resolvable:$true] %s219
          %222 = dma.hbm_to_vmem [thread:$0]  %s217, 256, %s220, %s208
        $region24: #{tpu_custom_call.1} parent=19 // pred_fallthru
          _
        // Predicated region
        $region25: #{tpu_custom_call.1} parent=19 // pred_check
          %p223 = pneg %p67
        $region26: #{tpu_custom_call.1} parent=19 // pred_check_branch
          %225 = sbr.rel (%p223) target = $region28
        $region27: #{tpu_custom_call.1} parent=19 // pred_region
          %s226 = sand.u32 %s21, 1
          %s227 = scalar_lea.sflag [#allocation6], %s226
          %s228 = sand.u32 %s57, 1
          %s229 = smul.addr %s228, 8
          %s230 = scalar_lea.vmem [#allocation5], %s229
          %s232 = ssub.s32 128, 128
          %233 = vsyncadd %s227, %s232
          %s234 = smul.addr %s21, 128
          %s235 = scalar_lea.hbm %s1, %s234
          %s237 = sshll.u32 %s230, 4
          %s238 = int_to_ptr.vmem [resolvable:$true] %s237
          %240 = dma.hbm_to_vmem [thread:$0]  %s235, 128, %s238, %s227
        $region28: #{tpu_custom_call.1} parent=19 // pred_fallthru
          _
      $region20: #{tpu_custom_call.1} parent=5 // pred_fallthru
        _
      %p241 = scmp.le.s32.totalorder 1, %s21
      %p242 = scmp.lt.s32.totalorder %s21, 3
      %p243 = pnand %p241, %p242
      %p244 = pneg %p243
      // Predicated region
      $region29: #{tpu_custom_call.1} parent=5 // pred_check
        _
      $region30: #{tpu_custom_call.1} parent=5 // pred_check_branch
        %246 = sbr.rel (%p243) target = $region32
      $region31: #{tpu_custom_call.1} parent=5 // pred_region
        %s247 = ssub.s32 %s21, 1
        %s248 = sand.u32 %s34, 1
        %s249 = scalar_lea.sflag [#allocation3], %s248
        %s250 = sand.u32 %s34, 1
        %s251 = smul.addr %s250, 16
        %s252 = scalar_lea.vmem [#allocation2], %s251
        // Predicated region
        $region33: #{tpu_custom_call.1} parent=31 // pred_check
          %p253 = pneg %p47
        $region34: #{tpu_custom_call.1} parent=31 // pred_check_branch
          %255 = sbr.rel (%p253) target = $region36
        $region35: #{tpu_custom_call.1} parent=31 // pred_region
          %256 = dma.done %s249, 256
        $region36: #{tpu_custom_call.1} parent=31 // pred_fallthru
          _
        %s257 = sand.u32 %s26, 1
        %s258 = scalar_lea.sflag [#allocation6], %s257
        %s259 = sand.u32 %s60, 1
        %s260 = smul.addr %s259, 8
        %s261 = scalar_lea.vmem [#allocation5], %s260
        // Predicated region
        $region37: #{tpu_custom_call.1} parent=31 // pred_check
          %p262 = pneg %p73
        $region38: #{tpu_custom_call.1} parent=31 // pred_check_branch
          %264 = sbr.rel (%p262) target = $region40
        $region39: #{tpu_custom_call.1} parent=31 // pred_region
          %265 = dma.done %s258, 128
        $region40: #{tpu_custom_call.1} parent=31 // pred_fallthru
          _
        // Predicated region
        $region41: #{tpu_custom_call.1} parent=31 // pred_check
          %p266 = pneg %p94
        $region42: #{tpu_custom_call.1} parent=31 // pred_check_branch
          %268 = sbr.rel (%p266) target = $region44
        $region43: #{tpu_custom_call.1} parent=31 // pred_region
          %269 = dma.done [#allocation6], 768
        $region44: #{tpu_custom_call.1} parent=31 // pred_fallthru
          _
        %s270 = sand.u32 %s34, 1
        %s271 = scalar_lea.sflag [#allocation3], %s270
        %s272 = sand.u32 %s34, 1
        %s273 = smul.addr %s272, 16
        %s274 = scalar_lea.vmem [#allocation2], %s273
        %p275 = pneg %p47
        %p276 = pneg %p44
        %s277 = sand.u32 %s26, 1
        %s278 = scalar_lea.sflag [#allocation6], %s277
        %s279 = sand.u32 %s60, 1
        %s280 = smul.addr %s279, 8
        %s281 = scalar_lea.vmem [#allocation5], %s280
        %p282 = pneg %p73
        %p283 = pneg %p70
        %p284 = pneg %p94
        %p285 = pneg %p91
        %p286 = pneg %p120
        %p287 = pneg %p117
        %s288 = sand.u32 %s107, 1
        %s289 = scalar_lea.sflag [#allocation4], %s288
        %s290 = sand.u32 %s107, 1
        %s291 = smul.addr %s290, 8
        %s292 = scalar_lea.vmem [#allocation8], %s291
        %p293 = pneg %p146
        %p294 = pneg %p143
        %p295 = scmp.lt.s32.totalorder %s26, 1
        %s296 = scalar_select %p295, %s26, 1
        %s297 = smul.addr %s296, 8
        %s298 = scalar_lea.vmem %s4, %s297
        %p299 = pneg %p172
        %p300 = pneg %p169
        %p301 = scmp.lt.s32.totalorder %s26, 1
        %s302 = scalar_select %p301, %s26, 1
        %s303 = smul.addr %s302, 8
        %s304 = scalar_lea.vmem %s5, %s303
        %p305 = scmp.lt.s32.totalorder %s26, 1
        %s306 = scalar_select %p305, %s26, 1
        %s307 = smul.addr %s306, 8
        %s308 = scalar_lea.vmem %s4, %s307
        %p309 = scmp.lt.s32.totalorder %s26, 1
        %s310 = scalar_select %p309, %s26, 1
        %s311 = smul.addr %s310, 8
        %s312 = scalar_lea.vmem %s5, %s311
        %v313 = vld [vmem:[%s252] sm:$0xff]
        %v314 = vld [vmem:[%s252 + $0x8] sm:$0xff]
        %v315 = vld [vmem:[%s261] sm:$0xff]
        %v316 = vld [vmem:[#allocation7] sm:$0xff]
        %v317 = vld [vmem:[#allocation7 + $0x8] sm:$0xff]
        %v318 = vld [vmem:[#allocation7 + $0x10] sm:$0xff]
        %v319 = vld [vmem:[#allocation7 + $0x18] sm:$0xff]
        %v320 = vld [vmem:[#allocation7 + $0x20] sm:$0xff]
        %v321 = vld [vmem:[#allocation7 + $0x28] sm:$0xff]
        %324 = vrot.lane.b32.xlu0 %v313, 127
        %v325 = vpop.permute.xlu0 %324
        %326 = vrot.lane.b32.xlu0 %v314, 127
        %v327 = vpop.permute.xlu0 %326
        %vm328 = vcmask 1039360
        %v329 = vsel %vm328, %v325, %v327
        %331 = vrot.lane.b32.xlu0 %v313, 126
        %v332 = vpop.permute.xlu0 %331
        %333 = vrot.lane.b32.xlu0 %v314, 126
        %v334 = vpop.permute.xlu0 %333
        %vm335 = vcmask 1031168
        %v336 = vsel %vm335, %v332, %v334
        %338 = vrot.lane.b32.xlu0 %v313, 125
        %v339 = vpop.permute.xlu0 %338
        %340 = vrot.lane.b32.xlu0 %v314, 125
        %v341 = vpop.permute.xlu0 %340
        %vm342 = vcmask 1022976
        %v343 = vsel %vm342, %v339, %v341
        %345 = vrot.lane.b32.xlu0 %v313, 124
        %v346 = vpop.permute.xlu0 %345
        %347 = vrot.lane.b32.xlu0 %v314, 124
        %v348 = vpop.permute.xlu0 %347
        %vm349 = vcmask 1014784
        %v350 = vsel %vm349, %v346, %v348
        %352 = vrot.lane.b32.xlu0 %v313, 123
        %v353 = vpop.permute.xlu0 %352
        %354 = vrot.lane.b32.xlu0 %v314, 123
        %v355 = vpop.permute.xlu0 %354
        %vm356 = vcmask 1006592
        %v357 = vsel %vm356, %v353, %v355
        %359 = vrot.lane.b32.xlu0 %v313, 122
        %v360 = vpop.permute.xlu0 %359
        %361 = vrot.lane.b32.xlu0 %v314, 122
        %v362 = vpop.permute.xlu0 %361
        %vm363 = vcmask 998400
        %v364 = vsel %vm363, %v360, %v362
        %366 = vrot.lane.b32.xlu0 %v313, 121
        %v367 = vpop.permute.xlu0 %366
        %368 = vrot.lane.b32.xlu0 %v314, 121
        %v369 = vpop.permute.xlu0 %368
        %vm370 = vcmask 990208
        %v371 = vsel %vm370, %v367, %v369
        %373 = vrot.lane.b32.xlu0 %v313, 120
        %v374 = vpop.permute.xlu0 %373
        %375 = vrot.lane.b32.xlu0 %v314, 120
        %v376 = vpop.permute.xlu0 %375
        %vm377 = vcmask 982016
        %v378 = vsel %vm377, %v374, %v376
        %380 = vrot.lane.b32.xlu0 %v313, 119
        %v381 = vpop.permute.xlu0 %380
        %382 = vrot.lane.b32.xlu0 %v314, 119
        %v383 = vpop.permute.xlu0 %382
        %vm384 = vcmask 973824
        %v385 = vsel %vm384, %v381, %v383
        %387 = vrot.lane.b32.xlu0 %v313, 118
        %v388 = vpop.permute.xlu0 %387
        %389 = vrot.lane.b32.xlu0 %v314, 118
        %v390 = vpop.permute.xlu0 %389
        %vm391 = vcmask 965632
        %v392 = vsel %vm391, %v388, %v390
        %394 = vrot.lane.b32.xlu0 %v313, 117
        %v395 = vpop.permute.xlu0 %394
        %396 = vrot.lane.b32.xlu0 %v314, 117
        %v397 = vpop.permute.xlu0 %396
        %vm398 = vcmask 957440
        %v399 = vsel %vm398, %v395, %v397
        %401 = vrot.lane.b32.xlu0 %v313, 116
        %v402 = vpop.permute.xlu0 %401
        %403 = vrot.lane.b32.xlu0 %v314, 116
        %v404 = vpop.permute.xlu0 %403
        %vm405 = vcmask 949248
        %v406 = vsel %vm405, %v402, %v404
        %408 = vrot.lane.b32.xlu0 %v313, 115
        %v409 = vpop.permute.xlu0 %408
        %410 = vrot.lane.b32.xlu0 %v314, 115
        %v411 = vpop.permute.xlu0 %410
        %vm412 = vcmask 941056
        %v413 = vsel %vm412, %v409, %v411
        %415 = vrot.lane.b32.xlu0 %v313, 114
        %v416 = vpop.permute.xlu0 %415
        %417 = vrot.lane.b32.xlu0 %v314, 114
        %v418 = vpop.permute.xlu0 %417
        %vm419 = vcmask 932864
        %v420 = vsel %vm419, %v416, %v418
        %422 = vrot.lane.b32.xlu0 %v313, 113
        %v423 = vpop.permute.xlu0 %422
        %424 = vrot.lane.b32.xlu0 %v314, 113
        %v425 = vpop.permute.xlu0 %424
        %vm426 = vcmask 924672
        %v427 = vsel %vm426, %v423, %v425
        %429 = vrot.lane.b32.xlu0 %v313, 112
        %v430 = vpop.permute.xlu0 %429
        %431 = vrot.lane.b32.xlu0 %v314, 112
        %v432 = vpop.permute.xlu0 %431
        %433 = vrot.lane.b32.xlu0 %v329, 112
        %v434 = vpop.permute.xlu0 %433
        %435 = vrot.lane.b32.xlu0 %v327, 112
        %v436 = vpop.permute.xlu0 %435
        %437 = vrot.lane.b32.xlu0 %v336, 112
        %v438 = vpop.permute.xlu0 %437
        %439 = vrot.lane.b32.xlu0 %v334, 112
        %v440 = vpop.permute.xlu0 %439
        %441 = vrot.lane.b32.xlu0 %v343, 112
        %v442 = vpop.permute.xlu0 %441
        %443 = vrot.lane.b32.xlu0 %v341, 112
        %v444 = vpop.permute.xlu0 %443
        %445 = vrot.lane.b32.xlu0 %v350, 112
        %v446 = vpop.permute.xlu0 %445
        %447 = vrot.lane.b32.xlu0 %v348, 112
        %v448 = vpop.permute.xlu0 %447
        %449 = vrot.lane.b32.xlu0 %v357, 112
        %v450 = vpop.permute.xlu0 %449
        %451 = vrot.lane.b32.xlu0 %v355, 112
        %v452 = vpop.permute.xlu0 %451
        %453 = vrot.lane.b32.xlu0 %v364, 112
        %v454 = vpop.permute.xlu0 %453
        %455 = vrot.lane.b32.xlu0 %v362, 112
        %v456 = vpop.permute.xlu0 %455
        %457 = vrot.lane.b32.xlu0 %v371, 112
        %v458 = vpop.permute.xlu0 %457
        %459 = vrot.lane.b32.xlu0 %v369, 112
        %v460 = vpop.permute.xlu0 %459
        %461 = vrot.lane.b32.xlu0 %v378, 112
        %v462 = vpop.permute.xlu0 %461
        %463 = vrot.lane.b32.xlu0 %v376, 112
        %v464 = vpop.permute.xlu0 %463
        %465 = vrot.lane.b32.xlu0 %v385, 112
        %v466 = vpop.permute.xlu0 %465
        %467 = vrot.lane.b32.xlu0 %v383, 112
        %v468 = vpop.permute.xlu0 %467
        %469 = vrot.lane.b32.xlu0 %v392, 112
        %v470 = vpop.permute.xlu0 %469
        %471 = vrot.lane.b32.xlu0 %v390, 112
        %v472 = vpop.permute.xlu0 %471
        %473 = vrot.lane.b32.xlu0 %v399, 112
        %v474 = vpop.permute.xlu0 %473
        %475 = vrot.lane.b32.xlu0 %v397, 112
        %v476 = vpop.permute.xlu0 %475
        %477 = vrot.lane.b32.xlu0 %v406, 112
        %v478 = vpop.permute.xlu0 %477
        %479 = vrot.lane.b32.xlu0 %v404, 112
        %v480 = vpop.permute.xlu0 %479
        %481 = vrot.lane.b32.xlu0 %v413, 112
        %v482 = vpop.permute.xlu0 %481
        %483 = vrot.lane.b32.xlu0 %v411, 112
        %v484 = vpop.permute.xlu0 %483
        %485 = vrot.lane.b32.xlu0 %v420, 112
        %v486 = vpop.permute.xlu0 %485
        %487 = vrot.lane.b32.xlu0 %v418, 112
        %v488 = vpop.permute.xlu0 %487
        %489 = vrot.lane.b32.xlu0 %v427, 112
        %v490 = vpop.permute.xlu0 %489
        %491 = vrot.lane.b32.xlu0 %v425, 112
        %v492 = vpop.permute.xlu0 %491
        %vm493 = vcmask 916480
        %v494 = vsel %vm493, %v430, %v432
        %v495 = vsel %vm493, %v434, %v436
        %v496 = vsel %vm493, %v438, %v440
        %v497 = vsel %vm493, %v442, %v444
        %v498 = vsel %vm493, %v446, %v448
        %v499 = vsel %vm493, %v450, %v452
        %v500 = vsel %vm493, %v454, %v456
        %v501 = vsel %vm493, %v458, %v460
        %v502 = vsel %vm493, %v462, %v464
        %v503 = vsel %vm493, %v466, %v468
        %v504 = vsel %vm493, %v470, %v472
        %v505 = vsel %vm493, %v474, %v476
        %v506 = vsel %vm493, %v478, %v480
        %v507 = vsel %vm493, %v482, %v484
        %v508 = vsel %vm493, %v486, %v488
        %v509 = vsel %vm493, %v490, %v492
        %526 = vrot.lane.b32.xlu0 %v313, 96
        %v527 = vpop.permute.xlu0 %526
        %528 = vrot.lane.b32.xlu0 %v314, 96
        %v529 = vpop.permute.xlu0 %528
        %530 = vrot.lane.b32.xlu0 %v329, 96
        %v531 = vpop.permute.xlu0 %530
        %532 = vrot.lane.b32.xlu0 %v327, 96
        %v533 = vpop.permute.xlu0 %532
        %534 = vrot.lane.b32.xlu0 %v336, 96
        %v535 = vpop.permute.xlu0 %534
        %536 = vrot.lane.b32.xlu0 %v334, 96
        %v537 = vpop.permute.xlu0 %536
        %538 = vrot.lane.b32.xlu0 %v343, 96
        %v539 = vpop.permute.xlu0 %538
        %540 = vrot.lane.b32.xlu0 %v341, 96
        %v541 = vpop.permute.xlu0 %540
        %542 = vrot.lane.b32.xlu0 %v350, 96
        %v543 = vpop.permute.xlu0 %542
        %544 = vrot.lane.b32.xlu0 %v348, 96
        %v545 = vpop.permute.xlu0 %544
        %546 = vrot.lane.b32.xlu0 %v357, 96
        %v547 = vpop.permute.xlu0 %546
        %548 = vrot.lane.b32.xlu0 %v355, 96
        %v549 = vpop.permute.xlu0 %548
        %550 = vrot.lane.b32.xlu0 %v364, 96
        %v551 = vpop.permute.xlu0 %550
        %552 = vrot.lane.b32.xlu0 %v362, 96
        %v553 = vpop.permute.xlu0 %552
        %vm554 = vcmask 785408
        %v555 = vsel %vm554, %v527, %v529
        %v556 = vsel %vm554, %v531, %v533
        %v557 = vsel %vm554, %v535, %v537
        %v558 = vsel %vm554, %v539, %v541
        %v559 = vsel %vm554, %v543, %v545
        %v560 = vsel %vm554, %v547, %v549
        %v561 = vsel %vm554, %v551, %v553
        %vm569 = vcmask 457728
        %v571 = vsel %vm569, %v318, 0
        %v574 = vsel %vm569, %v321, 0
        %576 = vmatprep.subr.mxu0 0.0
        %577 = vmatpush1.msra.mxu0 %v313
        %578 = vmatprep.subr.mxu0 0.0
        %579 = vmatpush1.msra.mxu0 %v329
        %580 = vmatprep.subr.mxu0 0.0
        %581 = vmatpush1.msra.mxu0 %v336
        %582 = vmatprep.subr.mxu0 0.0
        %583 = vmatpush1.msra.mxu0 %v343
        %584 = vmatprep.subr.mxu0 0.0
        %585 = vmatpush1.msra.mxu0 %v350
        %586 = vmatprep.subr.mxu0 0.0
        %587 = vmatpush1.msra.mxu0 %v357
        %588 = vmatprep.subr.mxu0 0.0
        %589 = vmatpush1.msra.mxu0 %v364
        %590 = vmatprep.subr.mxu0 0.0
        %591 = vmatpush1.msra.mxu0 %v371
        %592 = vmatprep.subr.mxu0 0.0
        %593 = vmatpush1.msra.mxu0 %v378
        %594 = vmatprep.subr.mxu0 0.0
        %595 = vmatpush1.msra.mxu0 %v385
        %596 = vmatprep.subr.mxu0 0.0
        %597 = vmatpush1.msra.mxu0 %v392
        %598 = vmatprep.subr.mxu0 0.0
        %599 = vmatpush1.msra.mxu0 %v399
        %600 = vmatprep.subr.mxu0 0.0
        %601 = vmatpush1.msra.mxu0 %v406
        %602 = vmatprep.subr.mxu0 0.0
        %603 = vmatpush1.msra.mxu0 %v413
        %604 = vmatprep.subr.mxu0 0.0
        %605 = vmatpush1.msra.mxu0 %v420
        %606 = vmatprep.subr.mxu0 0.0
        %607 = vmatpush1.msra.mxu0 %v427
        %608 = vmatprep.subr.mxu0 0.0
        %609 = vmatpush1.msra.mxu0 %v494
        %610 = vmatprep.subr.mxu0 0.0
        %611 = vmatpush1.msra.mxu0 %v495
        %612 = vmatprep.subr.mxu0 0.0
        %613 = vmatpush1.msra.mxu0 %v496
        %614 = vmatprep.subr.mxu0 0.0
        %615 = vmatpush1.msra.mxu0 %v497
        %616 = vmatprep.subr.mxu0 0.0
        %617 = vmatpush1.msra.mxu0 %v498
        %618 = vmatprep.subr.mxu0 0.0
        %619 = vmatpush1.msra.mxu0 %v499
        %620 = vmatprep.subr.mxu0 0.0
        %621 = vmatpush1.msra.mxu0 %v500
        %622 = vmatprep.subr.mxu0 0.0
        %623 = vmatpush1.msra.mxu0 %v501
        %624 = vmatprep.subr.mxu0 0.0
        %625 = vmatpush1.msra.mxu0 %v502
        %626 = vmatprep.subr.mxu0 0.0
        %627 = vmatpush1.msra.mxu0 %v503
        %628 = vmatprep.subr.mxu0 0.0
        %629 = vmatpush1.msra.mxu0 %v504
        %630 = vmatprep.subr.mxu0 0.0
        %631 = vmatpush1.msra.mxu0 %v505
        %632 = vmatprep.subr.mxu0 0.0
        %633 = vmatpush1.msra.mxu0 %v506
        %634 = vmatprep.subr.mxu0 0.0
        %635 = vmatpush1.msra.mxu0 %v507
        %636 = vmatprep.subr.mxu0 0.0
        %637 = vmatpush1.msra.mxu0 %v508
        %638 = vmatprep.subr.mxu0 0.0
        %639 = vmatpush1.msra.mxu0 %v509
        %640 = vmatprep.mubr.f32.mxu0 %v317
        %641 = vmatmul.mubr.f32.gmra.mrb[0].mxu0 %v316
        %v642 = vpop.f32.mrb[0].mxu0
        %v643 = vadd.f32 0.0, %v642
        %v644 = vpop.f32.mrb[0].mxu0
        %645 = vmatprep.mubr.f32.mxu0 %v320
        %646 = vmatmul.mubr.f32.gmra.mrb[0].mxu0 %v319
        %v647 = vpop.f32.mrb[0].mxu0
        %v648 = vadd.f32 0.0, %v647
        %v649 = vpop.f32.mrb[0].mxu0
        %650 = vdwg.mxu0
        %651 = vmatprep.subr.mxu0 0.0
        %652 = vmatpush1.msra.mxu0 %v555
        %653 = vmatprep.subr.mxu0 0.0
        %654 = vmatpush1.msra.mxu0 %v556
        %655 = vmatprep.subr.mxu0 0.0
        %656 = vmatpush1.msra.mxu0 %v557
        %657 = vmatprep.subr.mxu0 0.0
        %658 = vmatpush1.msra.mxu0 %v558
        %659 = vmatprep.subr.mxu0 0.0
        %660 = vmatpush1.msra.mxu0 %v559
        %661 = vmatprep.subr.mxu0 0.0
        %662 = vmatpush1.msra.mxu0 %v560
        %663 = vmatprep.subr.mxu0 0.0
        %664 = vmatpush1.msra.mxu0 %v561
        %665 = vmatprep.subr.mxu0 0.0
        %666 = vmatpush1.msra.mxu0 0.0
        %667 = vmatprep.subr.mxu0 0.0
        %668 = vmatpush1.msra.mxu0 0.0
        %669 = vmatprep.subr.mxu0 0.0
        %670 = vmatpush1.msra.mxu0 0.0
        %671 = vmatprep.subr.mxu0 0.0
        %672 = vmatpush1.msra.mxu0 0.0
        %673 = vmatprep.subr.mxu0 0.0
        %674 = vmatpush1.msra.mxu0 0.0
        %675 = vmatprep.subr.mxu0 0.0
        %676 = vmatpush1.msra.mxu0 0.0
        %677 = vmatprep.subr.mxu0 0.0
        %678 = vmatpush1.msra.mxu0 0.0
        %679 = vmatprep.subr.mxu0 0.0
        %680 = vmatpush1.msra.mxu0 0.0
        %681 = vmatprep.subr.mxu0 0.0
        %682 = vmatpush1.msra.mxu0 0.0
        %683 = vmatprep.subr.mxu0 0.0
        %684 = vmatpush1.msra.mxu0 0.0
        %685 = vmatprep.subr.mxu0 0.0
        %686 = vmatpush1.msra.mxu0 0.0
        %687 = vmatprep.subr.mxu0 0.0
        %688 = vmatpush1.msra.mxu0 0.0
        %689 = vmatprep.subr.mxu0 0.0
        %690 = vmatpush1.msra.mxu0 0.0
        %691 = vmatprep.subr.mxu0 0.0
        %692 = vmatpush1.msra.mxu0 0.0
        %693 = vmatprep.subr.mxu0 0.0
        %694 = vmatpush1.msra.mxu0 0.0
        %695 = vmatprep.subr.mxu0 0.0
        %696 = vmatpush1.msra.mxu0 0.0
        %697 = vmatprep.subr.mxu0 0.0
        %698 = vmatpush1.msra.mxu0 0.0
        %699 = vmatprep.subr.mxu0 0.0
        %700 = vmatpush1.msra.mxu0 0.0
        %701 = vmatprep.subr.mxu0 0.0
        %702 = vmatpush1.msra.mxu0 0.0
        %703 = vmatprep.subr.mxu0 0.0
        %704 = vmatpush1.msra.mxu0 0.0
        %705 = vmatprep.subr.mxu0 0.0
        %706 = vmatpush1.msra.mxu0 0.0
        %707 = vmatprep.subr.mxu0 0.0
        %708 = vmatpush1.msra.mxu0 0.0
        %709 = vmatprep.subr.mxu0 0.0
        %710 = vmatpush1.msra.mxu0 0.0
        %711 = vmatprep.subr.mxu0 0.0
        %712 = vmatpush1.msra.mxu0 0.0
        %713 = vmatprep.subr.mxu0 0.0
        %714 = vmatpush1.msra.mxu0 0.0
        %715 = vmatprep.mubr.f32.mxu0 0.0
        %716 = vmatmul.mubr.f32.gmra.mrb[0].mxu0 %v571
        %v717 = vpop.f32.mrb[0].mxu0
        %v718 = vadd.f32 %v643, %v717
        %v719 = vpop.f32.mrb[0].mxu0
        %720 = vmatprep.mubr.f32.mxu0 0.0
        %721 = vmatmul.mubr.f32.gmra.mrb[0].mxu0 %v574
        %v722 = vpop.f32.mrb[0].mxu0
        %v723 = vadd.f32 %v648, %v722
        %v724 = vpop.f32.mrb[0].mxu0
        %725 = vdwg.mxu0
        %v726 = vlaneseq
        %v727 = vand.u32 %v726, 127
        %v728 = vsub.s32 %v315, %v727
        %729 = vrot.lane.b32.xlu0 %v728, 127
        %v730 = vpop.permute.xlu0 %729
        %v731 = vsel %vm328, %v730, 0
        %733 = vrot.lane.b32.xlu0 %v723, 127
        %v734 = vpop.permute.xlu0 %733
        %v736 = vsel %vm328, %v734, 0.0
        %737 = vrot.lane.b32.xlu0 %v728, 1
        %v738 = vpop.permute.xlu0 %737
        %vm739 = vcmask 7168
        %v740 = vsel %vm739, 0, %v738
        %741 = vrot.lane.b32.xlu0 %v723, 1
        %v742 = vpop.permute.xlu0 %741
        %v744 = vsel %vm739, 0.0, %v742
        %vm745 = vcmp.eq.s32.totalorder %v731, 4294967295
        %vm746 = vcmp.eq.s32.totalorder %v728, 0
        %vm747 = vcmp.eq.s32.totalorder %v740, 1
        %v748 = vsel %vm747, %v744, 0.0
        %v749 = vsel %vm746, %v723, %v748
        %v750 = vsel %vm745, %v736, %v749
        %vm751 = vcmp.lt.s32.totalorder %v727, 32
        %v752 = vadd.f32 %v718, %v750
        %v753 = vsel %vm751, %v752, 0.0
        %754 = vst [vmem:[%s292] sm:$0xff] %v753
        %755 = vadd.xlane.f32.xlu0 %v753
        %v756 = vpop.xlane.xlu0 %755
        %757 = vst.msk [vmem:[%s308] sm:$0xff] %vm739, %v756
        %v758 = vmul.f32 %v753, %v753
        %759 = vadd.xlane.f32.xlu0 %v758
        %v760 = vpop.xlane.xlu0 %759
        %761 = vst.msk [vmem:[%s312] sm:$0xff] %vm739, %v760
        %s762 = sand.u32 %s107, 1
        %s763 = scalar_lea.sflag [#allocation4], %s762
        %s764 = sand.u32 %s107, 1
        %s765 = smul.addr %s764, 8
        %s766 = scalar_lea.vmem [#allocation8], %s765
        %p767 = scmp.lt.s32.totalorder %s26, 1
        %s768 = scalar_select %p767, %s26, 1
        %s769 = smul.addr %s768, 8
        %s770 = scalar_lea.vmem %s4, %s769
        %p771 = scmp.lt.s32.totalorder %s26, 1
        %s772 = scalar_select %p771, %s26, 1
        %s773 = smul.addr %s772, 8
        %s774 = scalar_lea.vmem %s5, %s773
        // Predicated region
        $region45: #{tpu_custom_call.1} parent=31 // pred_check
          %p775 = pneg %p117
        $region46: #{tpu_custom_call.1} parent=31 // pred_check_branch
          %777 = sbr.rel (%p775) target = $region48
        $region47: #{tpu_custom_call.1} parent=31 // pred_region
          %s779 = ssub.s32 128, 128
          %780 = vsyncadd %s763, %s779
          %s781 = smul.addr %s26, 128
          %s782 = scalar_lea.hbm %s3, %s781
          %s784 = sshll.u32 %s766, 4
          %s785 = int_to_ptr.vmem [resolvable:$true] %s784
          %787 = dma.vmem_to_hbm [thread:$0]  %s785, 128, %s782, %s763
        $region48: #{tpu_custom_call.1} parent=31 // pred_fallthru
          _
        // Predicated region
        $region49: #{tpu_custom_call.1} parent=31 // pred_check
          %p788 = pneg %p143
        $region50: #{tpu_custom_call.1} parent=31 // pred_check_branch
          %790 = sbr.rel (%p788) target = $region52
        $region51: #{tpu_custom_call.1} parent=31 // pred_region
          _
        $region52: #{tpu_custom_call.1} parent=31 // pred_fallthru
          _
        // Predicated region
        $region53: #{tpu_custom_call.1} parent=31 // pred_check
          %p791 = pneg %p169
        $region54: #{tpu_custom_call.1} parent=31 // pred_check_branch
          %793 = sbr.rel (%p791) target = $region56
        $region55: #{tpu_custom_call.1} parent=31 // pred_region
          _
        $region56: #{tpu_custom_call.1} parent=31 // pred_fallthru
          _
      $region32: #{tpu_custom_call.1} parent=5 // pred_fallthru
        _
      %p794 = scmp.le.s32.totalorder 2, %s21
      // Predicated region
      $region57: #{tpu_custom_call.1} parent=5 // pred_check
        %p795 = pneg %p794
      $region58: #{tpu_custom_call.1} parent=5 // pred_check_branch
        %797 = sbr.rel (%p795) target = $region60
      $region59: #{tpu_custom_call.1} parent=5 // pred_region
        %s798 = ssub.s32 %s21, 2
        // Predicated region
        $region61: #{tpu_custom_call.1} parent=59 // pred_check
          %p799 = pneg %p123
        $region62: #{tpu_custom_call.1} parent=59 // pred_check_branch
          %801 = sbr.rel (%p799) target = $region64
        $region63: #{tpu_custom_call.1} parent=59 // pred_region
          %s802 = sand.u32 %s108, 1
          %s803 = scalar_lea.sflag [#allocation4], %s802
          %s804 = sand.u32 %s108, 1
          %s805 = smul.addr %s804, 8
          %s806 = scalar_lea.vmem [#allocation8], %s805
          %807 = dma.done %s803, 128
        $region64: #{tpu_custom_call.1} parent=59 // pred_fallthru
          _
        // Predicated region
        $region65: #{tpu_custom_call.1} parent=59 // pred_check
          %p808 = pneg %p149
        $region66: #{tpu_custom_call.1} parent=59 // pred_check_branch
          %810 = sbr.rel (%p808) target = $region68
        $region67: #{tpu_custom_call.1} parent=59 // pred_region
          %p811 = scmp.lt.s32.totalorder %s27, 1
          %s812 = scalar_select %p811, %s27, 1
          %s813 = smul.addr %s812, 8
          %s814 = scalar_lea.vmem %s4, %s813
        $region68: #{tpu_custom_call.1} parent=59 // pred_fallthru
          _
        // Predicated region
        $region69: #{tpu_custom_call.1} parent=59 // pred_check
          %p815 = pneg %p175
        $region70: #{tpu_custom_call.1} parent=59 // pred_check_branch
          %817 = sbr.rel (%p815) target = $region72
        $region71: #{tpu_custom_call.1} parent=59 // pred_region
          %p818 = scmp.lt.s32.totalorder %s27, 1
          %s819 = scalar_select %p818, %s27, 1
          %s820 = smul.addr %s819, 8
          %s821 = scalar_lea.vmem %s5, %s820
        $region72: #{tpu_custom_call.1} parent=59 // pred_fallthru
          _
      $region60: #{tpu_custom_call.1} parent=5 // pred_fallthru
        _
    $region6: #{tpu_custom_call.1} parent=1 // loop_footer
      %s25 = sadd.s32 1, %s21
    $region7: #{tpu_custom_call.1} parent=1 // loop_footer_branch
      %20 = sbr.rel target = $region3
    $region8: #{tpu_custom_call.1} parent=1 // loop_exit
      _
    %822 = vsyncpa [#allocation3], 1
    %s823 = scalar_lea.sflag [#allocation3], 1
    %824 = vsyncpa %s823, 1
    %825 = vsyncpa [#allocation6], 1
    %s826 = scalar_lea.sflag [#allocation6], 1
    %827 = vsyncpa %s826, 1
    %828 = vsyncpa [#allocation4], 1
    %s829 = scalar_lea.sflag [#allocation4], 1
    %830 = vsyncpa %s829, 1

</llo_original>
